<compile_context>
chip_gen: v7x
topology: tpu7x:2x2x1
jax: 0.10.0
libtpu: 0.0.40
codegen_flags: <defaults>
</compile_context>

<pallas_src>
import jax
import jax.numpy as jnp
from jax.experimental import pallas as pl
from jax.experimental.pallas import tpu as pltpu
import numpy as np


def _round_up(n, m):
    return ((n + m - 1) // m) * m


def _mlp_kernel(x_ref, w1_ref, b1_ref, w2_ref, b2_ref, w3_ref, b3_ref, o_ref):
    # Layer 1: (TB, D) bf16 @ (D, Hp) bf16 -> f32 accumulate, bias + ReLU in f32.
    h1 = jnp.dot(x_ref[...], w1_ref[...], preferred_element_type=jnp.float32)
    h1 = jnp.maximum(h1 + b1_ref[...], 0.0)
    # Layer 2: cast activations to bf16 for the MXU, accumulate in f32.
    h2 = jnp.dot(h1.astype(w2_ref.dtype), w2_ref[...],
                 preferred_element_type=jnp.float32)
    h2 = jnp.maximum(h2 + b2_ref[...], 0.0)
    # Layer 3 (out_features=1): VPU multiply + XLU lane reduction — avoids an
    # MXU matmul that would use only 1 of 128 result lanes.
    out = jnp.sum(h2 * w3_ref[...], axis=-1, keepdims=True) + b3_ref[0, 0]
    o_ref[...] = out.astype(o_ref.dtype)


def value_function_forward(x, params, *, block_b=1024):
    """Fused forward pass of ValueFunction.

    x: (B, state_dim + action_dim) float32
    params: dict with w1 (D,H), b1 (1,H), w2 (H,H), b2 (1,H), w3 (H,1), b3 (1,1)
    returns: (B, 1) float32
    """
    B, D = x.shape
    w1, b1 = params["w1"], params["b1"]
    w2, b2 = params["w2"], params["b2"]
    w3, b3 = params["w3"], params["b3"]
    H = w1.shape[1]

    # Zero-pad the hidden dim to a full 128-lane width (exact through ReLU).
    Hp = _round_up(max(H, 128), 128)
    ph = Hp - H
    w1p = jnp.pad(w1, ((0, 0), (0, ph))).astype(jnp.bfloat16)
    b1p = jnp.pad(b1, ((0, 0), (0, ph))).astype(jnp.float32)
    w2p = jnp.pad(w2, ((0, ph), (0, ph))).astype(jnp.bfloat16)
    b2p = jnp.pad(b2, ((0, 0), (0, ph))).astype(jnp.float32)
    w3p = jnp.pad(w3.T, ((0, 0), (0, ph))).astype(jnp.float32)  # (1, Hp), f32 (VPU)
    b3p = b3.astype(jnp.float32).reshape(1, 1)

    # Batch tiling: tile is a multiple of 16 (bf16 sublane pack); pad B up.
    tb = min(_round_up(B, 16), _round_up(block_b, 16))
    Bp = _round_up(B, tb)
    xb = x.astype(jnp.bfloat16)
    if Bp != B:
        xb = jnp.pad(xb, ((0, Bp - B), (0, 0)))

    const = lambda i: (0, 0)  # weights/biases: same block every step -> stay resident
    cost = pl.CostEstimate(
        flops=2 * Bp * (D * Hp + Hp * Hp + Hp),
        transcendentals=0,
        bytes_accessed=(Bp * D * 2 + Bp * 4
                        + (D * Hp + Hp * Hp) * 2 + (3 * Hp + 1) * 4),
    )

    out = pl.pallas_call(
        _mlp_kernel,
        out_shape=jax.ShapeDtypeStruct((Bp, 1), jnp.float32),
        grid=(Bp // tb,),
        in_specs=[
            pl.BlockSpec((tb, D), lambda i: (i, 0)),   # x tiles, auto-pipelined
            pl.BlockSpec((D, Hp), const),
            pl.BlockSpec((1, Hp), const),
            pl.BlockSpec((Hp, Hp), const),
            pl.BlockSpec((1, Hp), const),
            pl.BlockSpec((1, Hp), const),
            pl.BlockSpec(memory_space=pltpu.MemorySpace.SMEM),  # b3 scalar
        ],
        out_specs=pl.BlockSpec((tb, 1), lambda i: (i, 0)),
        compiler_params=pltpu.CompilerParams(
            dimension_semantics=("parallel",)),
        cost_estimate=cost,
    )(xb, w1p, b1p, w2p, b2p, w3p, b3p)
    return out[:B]


def value_function_value(state, action, params, **kw):
    """Mirrors ValueFunction.value: concat along dim=1, then forward."""
    x = jnp.concatenate([state, action], axis=1)
    return value_function_forward(x, params, **kw)


def init_params(key, state_dim, action_dim, hidden_size):
    """Deterministic PyTorch-Linear-style init (uniform(-1/sqrt(fan_in), ...))."""
    d_in = state_dim + action_dim
    ks = jax.random.split(key, 6)

    def lin(kw, kb, fan_in, fan_out):
        bound = 1.0 / np.sqrt(fan_in)
        w = jax.random.uniform(kw, (fan_in, fan_out), jnp.float32, -bound, bound)
        b = jax.random.uniform(kb, (1, fan_out), jnp.float32, -bound, bound)
        return w, b

    w1, b1 = lin(ks[0], ks[1], d_in, hidden_size)
    w2, b2 = lin(ks[2], ks[3], hidden_size, hidden_size)
    w3, b3 = lin(ks[4], ks[5], hidden_size, 1)
    return {"w1": w1, "b1": b1, "w2": w2, "b2": b2, "w3": w3, "b3": b3}


def _reference(x, p):
    # Mirrors the kernel's bf16-input / f32-accumulation dataflow exactly.
    bf = lambda a: a.astype(jnp.bfloat16).astype(jnp.float32)
    h1 = jnp.maximum(bf(x) @ bf(p["w1"]) + p["b1"], 0.0)
    h2 = jnp.maximum(bf(h1) @ bf(p["w2"]) + p["b2"], 0.0)
    return jnp.sum(h2 * p["w3"].T, axis=-1, keepdims=True) + p["b3"]


if __name__ == "__main__":
    action_dim, state_dim, hidden_size = 4, 12, 32

    key = jax.random.PRNGKey(0)
    k_params, k_state, k_action = jax.random.split(key, 3)
    params = init_params(k_params, state_dim, action_dim, hidden_size)

    # Case 1: tiny batch (B=8 -> one padded 16-row tile).
    state = jax.random.normal(k_state, (8, state_dim), jnp.float32)
    action = jax.random.normal(k_action, (8, action_dim), jnp.float32)
    x = jnp.concatenate([state, action], axis=1)
    out = jax.block_until_ready(value_function_forward(x, params))
    ref = _reference(x, params)
    assert out.shape == (8, 1)
    np.testing.assert_allclose(np.asarray(out), np.asarray(ref),
                               rtol=1e-4, atol=1e-4)

    # Case 2: multi-tile batch with a ragged tail (B=200, tile=64 -> grid of 4).
    k2a, k2b = jax.random.split(jax.random.PRNGKey(1))
    state2 = jax.random.normal(k2a, (200, state_dim), jnp.float32)
    action2 = jax.random.normal(k2b, (200, action_dim), jnp.float32)
    out2 = jax.block_until_ready(
        value_function_value(state2, action2, params, block_b=64))
    ref2 = _reference(jnp.concatenate([state2, action2], axis=1), params)
    assert out2.shape == (200, 1)
    np.testing.assert_allclose(np.asarray(out2), np.asarray(ref2),
                               rtol=1e-4, atol=1e-4)

    print("KERNEL_OK")
</pallas_src>

<mosaic_0001>
module attributes {stable_mosaic.version = 11 : i64} {
  func.func @_mlp_kernel(%arg0: i32, %arg1: memref<16x16xbf16, #tpu.memory_space<vmem>>, %arg2: memref<16x128xbf16, #tpu.memory_space<vmem>>, %arg3: memref<1x128xf32, #tpu.memory_space<vmem>>, %arg4: memref<128x128xbf16, #tpu.memory_space<vmem>>, %arg5: memref<1x128xf32, #tpu.memory_space<vmem>>, %arg6: memref<1x128xf32, #tpu.memory_space<vmem>>, %arg7: memref<1x1xf32, #tpu.memory_space<smem>>, %arg8: memref<16x1xf32, #tpu.memory_space<vmem>>) attributes {dimension_semantics = [#tpu.dimension_semantics<parallel>], iteration_bounds = array<i64: 1>, scalar_prefetch = 0 : i64, scratch_operands = 0 : i64, tpu.core_type = #tpu.core_type<tc>, window_params = [{transform_indices = @transform_0, window_bounds = array<i64: 16, 16>}, {pipeline_mode = #tpu.pipeline_mode<synchronous>, transform_indices = @transform_1, window_bounds = array<i64: 16, 128>}, {pipeline_mode = #tpu.pipeline_mode<synchronous>, transform_indices = @transform_2, window_bounds = array<i64: 1, 128>}, {pipeline_mode = #tpu.pipeline_mode<synchronous>, transform_indices = @transform_3, window_bounds = array<i64: 128, 128>}, {pipeline_mode = #tpu.pipeline_mode<synchronous>, transform_indices = @transform_4, window_bounds = array<i64: 1, 128>}, {pipeline_mode = #tpu.pipeline_mode<synchronous>, transform_indices = @transform_5, window_bounds = array<i64: 1, 128>}, {transform_indices = @transform_6, window_bounds = array<i64: 1, 1>}, {transform_indices = @transform_7, window_bounds = array<i64: 16, 1>}]} {
    %c0 = arith.constant 0 : index
    %c0_0 = arith.constant 0 : index
    %0 = vector.load %arg1[%c0, %c0_0] : memref<16x16xbf16, #tpu.memory_space<vmem>>, vector<16x16xbf16>
    %c0_1 = arith.constant 0 : index
    %c0_2 = arith.constant 0 : index
    %1 = vector.load %arg2[%c0_1, %c0_2] : memref<16x128xbf16, #tpu.memory_space<vmem>>, vector<16x128xbf16>
    %cst = arith.constant dense<0.000000e+00> : vector<16x128xf32>
    %2 = tpu.matmul %0, %1, %cst {dimension_numbers = #tpu.dot_dimension_numbers<[1], [0], [0], [1], [0, 0, 1, 1], [], []>} : vector<16x16xbf16>, vector<16x128xbf16>, vector<16x128xf32> -> vector<16x128xf32>
    %c0_3 = arith.constant 0 : index
    %c0_4 = arith.constant 0 : index
    %3 = vector.load %arg3[%c0_3, %c0_4] : memref<1x128xf32, #tpu.memory_space<vmem>>, vector<1x128xf32>
    %4 = vector.broadcast %3 : vector<1x128xf32> to vector<16x128xf32>
    %5 = arith.addf %2, %4 : vector<16x128xf32>
    %cst_5 = arith.constant 0.000000e+00 : f32
    %6 = vector.broadcast %cst_5 : f32 to vector<16x128xf32>
    %7 = arith.maximumf %5, %6 : vector<16x128xf32>
    %8 = arith.truncf %7 : vector<16x128xf32> to vector<16x128xbf16>
    %c0_6 = arith.constant 0 : index
    %c0_7 = arith.constant 0 : index
    %9 = vector.load %arg4[%c0_6, %c0_7] : memref<128x128xbf16, #tpu.memory_space<vmem>>, vector<128x128xbf16>
    %cst_8 = arith.constant dense<0.000000e+00> : vector<16x128xf32>
    %10 = tpu.matmul %8, %9, %cst_8 {dimension_numbers = #tpu.dot_dimension_numbers<[1], [0], [0], [1], [0, 0, 1, 1], [], []>} : vector<16x128xbf16>, vector<128x128xbf16>, vector<16x128xf32> -> vector<16x128xf32>
    %c0_9 = arith.constant 0 : index
    %c0_10 = arith.constant 0 : index
    %11 = vector.load %arg5[%c0_9, %c0_10] : memref<1x128xf32, #tpu.memory_space<vmem>>, vector<1x128xf32>
    %12 = vector.broadcast %11 : vector<1x128xf32> to vector<16x128xf32>
    %13 = arith.addf %10, %12 : vector<16x128xf32>
    %cst_11 = arith.constant 0.000000e+00 : f32
    %14 = vector.broadcast %cst_11 : f32 to vector<16x128xf32>
    %15 = arith.maximumf %13, %14 : vector<16x128xf32>
    %c0_12 = arith.constant 0 : index
    %c0_13 = arith.constant 0 : index
    %16 = vector.load %arg6[%c0_12, %c0_13] : memref<1x128xf32, #tpu.memory_space<vmem>>, vector<1x128xf32>
    %17 = vector.broadcast %16 : vector<1x128xf32> to vector<16x128xf32>
    %18 = arith.mulf %15, %17 : vector<16x128xf32>
    %cst_14 = arith.constant dense<0.000000e+00> : vector<16xf32>
    %19 = vector.multi_reduction <add>, %18, %cst_14 [1] : vector<16x128xf32> to vector<16xf32>
    %20 = vector.shape_cast %19 : vector<16xf32> to vector<16x1xf32>
    %c0_15 = arith.constant 0 : index
    %c0_16 = arith.constant 0 : index
    %21 = memref.load %arg7[%c0_15, %c0_16] : memref<1x1xf32, #tpu.memory_space<smem>>
    %22 = vector.broadcast %21 : f32 to vector<16x1xf32>
    %23 = arith.addf %20, %22 : vector<16x1xf32>
    %c0_17 = arith.constant 0 : index
    %c0_18 = arith.constant 0 : index
    %24 = vector.load %arg8[%c0_17, %c0_18] : memref<16x1xf32, #tpu.memory_space<vmem>>, vector<16x1xf32>
    tpu.vector_store %arg8[%c0_17, %c0_18], %23 {strides = array<i32>} : memref<16x1xf32, #tpu.memory_space<vmem>>, vector<16x1xf32>,
    return
  }
  func.func @transform_0(%arg0: i32) -> (i32, i32) {
    %c0_i32 = arith.constant 0 : i32
    %c0_i32_0 = arith.constant 0 : i32
    return %arg0, %c0_i32 : i32, i32
  }
  func.func @transform_1(%arg0: i32) -> (i32, i32) {
    %c0_i32 = arith.constant 0 : i32
    %c0_i32_0 = arith.constant 0 : i32
    %c0_i32_1 = arith.constant 0 : i32
    return %c0_i32, %c0_i32_0 : i32, i32
  }
  func.func @transform_2(%arg0: i32) -> (i32, i32) {
    %c0_i32 = arith.constant 0 : i32
    %c0_i32_0 = arith.constant 0 : i32
    %c0_i32_1 = arith.constant 0 : i32
    return %c0_i32, %c0_i32_0 : i32, i32
  }
  func.func @transform_3(%arg0: i32) -> (i32, i32) {
    %c0_i32 = arith.constant 0 : i32
    %c0_i32_0 = arith.constant 0 : i32
    %c0_i32_1 = arith.constant 0 : i32
    return %c0_i32, %c0_i32_0 : i32, i32
  }
  func.func @transform_4(%arg0: i32) -> (i32, i32) {
    %c0_i32 = arith.constant 0 : i32
    %c0_i32_0 = arith.constant 0 : i32
    %c0_i32_1 = arith.constant 0 : i32
    return %c0_i32, %c0_i32_0 : i32, i32
  }
  func.func @transform_5(%arg0: i32) -> (i32, i32) {
    %c0_i32 = arith.constant 0 : i32
    %c0_i32_0 = arith.constant 0 : i32
    %c0_i32_1 = arith.constant 0 : i32
    return %c0_i32, %c0_i32_0 : i32, i32
  }
  func.func @transform_6(%arg0: i32) -> (i32, i32) {
    %c0_i32 = arith.constant 0 : i32
    %c0_i32_0 = arith.constant 0 : i32
    %c0_i32_1 = arith.constant 0 : i32
    return %c0_i32, %c0_i32_0 : i32, i32
  }
  func.func @transform_7(%arg0: i32) -> (i32, i32) {
    %c0_i32 = arith.constant 0 : i32
    %c0_i32_0 = arith.constant 0 : i32
    return %arg0, %c0_i32 : i32, i32
  }
}

</mosaic_0001>

<llo_original>
// kernel: tpu_custom_call.1
$region0: #{tpu_custom_call.1}
  #allocation0 [shape = 'u32[]', space=smem, size = 0x4, offset = 0x4, fixed_abs, tag = 'smem constant byte address 0x4 - core index']
  #allocation1 [shape = 'u32[144,128]{1,0:T(1,128)}', space=vmem, size = 0x12000, scoped, tag = 'internal scratch']
  #allocation2 [shape = 'f32[1,1]{1,0:T(1,128)S(6)}', space=smem, size = 0x200, scoped, tag = 'scoped memory for tpu_custom_call.1']
  %s0 = inlined_call_operand.hbm [shape: bf16[16,16], index: 0, kind: input, shape index: {}]
  %s1 = inlined_call_operand.hbm [shape: bf16[16,128], index: 1, kind: input, shape index: {}]
  %s2 = inlined_call_operand.vmem [shape: f32[1,128], index: 2, kind: input, shape index: {}]
  %s3 = inlined_call_operand.hbm [shape: bf16[128,128], index: 3, kind: input, shape index: {}]
  %s4 = inlined_call_operand.vmem [shape: f32[1,128], index: 4, kind: input, shape index: {}]
  %s5 = inlined_call_operand.vmem [shape: f32[1,128], index: 5, kind: input, shape index: {}]
  %s6 = inlined_call_operand.<no memory space> [shape: f32[1,1], index: 6, kind: input, shape index: {}]
  %s7 = inlined_call_operand.vmem [shape: f32[16,1], index: 7, kind: output, shape index: {}]
  %s8 = sld [smem:[#allocation0]]
  $region50: #{tpu_custom_call.1} parent=0
    _
  %s10 = ssub.s32 1, %s8
  %s11 = scalar_select 0, %s10, %s8
  %12 = sst [smem:[#allocation2]] %s6
  $region1: #{tpu_custom_call.1} parent=0
    #allocation3 [shape = 'u8[4096]{0}', space=vmem, size = 0x1000, scoped, tag = 'input window, operand 0, single buffered']
    #allocation4 [shape = 's32[1]{0}', space=sflag, size = 0x4, scoped, tag = 'scoped memory for tpu_custom_call.1']
    #allocation5 [shape = 'u8[4096]{0}', space=vmem, size = 0x1000, scoped, tag = 'input window, operand 1, single buffered']
    #allocation6 [shape = 's32[1]{0}', space=sflag, size = 0x4, scoped, tag = 'scoped memory for tpu_custom_call.1']
    #allocation7 [shape = 'u8[32768]{0}', space=vmem, size = 0x8000, scoped, tag = 'input window, operand 3, single buffered']
    %13 = vsyncpa [#allocation4], 0
    %14 = vsyncpa [#allocation6], 0
    // Predicated region
    $region2: #{tpu_custom_call.1} parent=1 // pred_check
      _
    $region3: #{tpu_custom_call.1} parent=1 // pred_check_branch
      %16 = sbr.rel (0) target = $region5
    $region4: #{tpu_custom_call.1} parent=1 // pred_region
      %s18 = ssub.s32 128, 128
      %19 = vsyncadd [#allocation4], %s18
      %s20 = sshll.u32 [#allocation3], 4
      %s21 = int_to_ptr.vmem [resolvable:$true] %s20
      %26 = dma.hbm_to_vmem [thread:$0]  %s0, 128, %s21, [#allocation4], 64, 64, 4
    $region5: #{tpu_custom_call.1} parent=1 // pred_fallthru
      _
    // Predicated region
    $region6: #{tpu_custom_call.1} parent=1 // pred_check
      _
    $region7: #{tpu_custom_call.1} parent=1 // pred_check_branch
      %28 = sbr.rel (0) target = $region9
    $region8: #{tpu_custom_call.1} parent=1 // pred_region
      %s30 = ssub.s32 128, 128
      %31 = vsyncadd [#allocation6], %s30
      %s32 = sshll.u32 [#allocation5], 4
      %s33 = int_to_ptr.vmem [resolvable:$true] %s32
      %38 = dma.hbm_to_vmem [thread:$0]  %s1, 128, %s33, [#allocation6], 64, 64, 4
    $region9: #{tpu_custom_call.1} parent=1 // pred_fallthru
      _
    // Predicated region
    $region10: #{tpu_custom_call.1} parent=1 // pred_check
      _
    $region11: #{tpu_custom_call.1} parent=1 // pred_check_branch
      %40 = sbr.rel (0) target = $region13
    $region12: #{tpu_custom_call.1} parent=1 // pred_region
      _
    $region13: #{tpu_custom_call.1} parent=1 // pred_fallthru
      _
    // Predicated region
    $region14: #{tpu_custom_call.1} parent=1 // pred_check
      _
    $region15: #{tpu_custom_call.1} parent=1 // pred_check_branch
      %42 = sbr.rel (0) target = $region17
    $region16: #{tpu_custom_call.1} parent=1 // pred_region
      %s44 = ssub.s32 1024, 1024
      %45 = vsyncadd [#allocation6], %s44
      %s46 = sshll.u32 [#allocation7], 4
      %s47 = int_to_ptr.vmem [resolvable:$true] %s46
      %52 = dma.hbm_to_vmem [thread:$0]  %s3, 1024, %s47, [#allocation6], 64, 64, 4
    $region17: #{tpu_custom_call.1} parent=1 // pred_fallthru
      _
    // Predicated region
    $region18: #{tpu_custom_call.1} parent=1 // pred_check
      _
    $region19: #{tpu_custom_call.1} parent=1 // pred_check_branch
      %54 = sbr.rel (0) target = $region21
    $region20: #{tpu_custom_call.1} parent=1 // pred_region
      _
    $region21: #{tpu_custom_call.1} parent=1 // pred_fallthru
      _
    // Predicated region
    $region22: #{tpu_custom_call.1} parent=1 // pred_check
      _
    $region23: #{tpu_custom_call.1} parent=1 // pred_check_branch
      %56 = sbr.rel (0) target = $region25
    $region24: #{tpu_custom_call.1} parent=1 // pred_region
      _
    $region25: #{tpu_custom_call.1} parent=1 // pred_fallthru
      _
    // Predicated region
    $region26: #{tpu_custom_call.1} parent=1 // pred_check
      _
    $region27: #{tpu_custom_call.1} parent=1 // pred_check_branch
      %58 = sbr.rel (0) target = $region29
    $region28: #{tpu_custom_call.1} parent=1 // pred_region
      _
    $region29: #{tpu_custom_call.1} parent=1 // pred_fallthru
      _
    // Predicated region
    $region30: #{tpu_custom_call.1} parent=1 // pred_check
      _
    $region31: #{tpu_custom_call.1} parent=1 // pred_check_branch
      %60 = sbr.rel (0) target = $region33
    $region32: #{tpu_custom_call.1} parent=1 // pred_region
      %61 = dma.done [#allocation4], 128
    $region33: #{tpu_custom_call.1} parent=1 // pred_fallthru
      _
    // Predicated region
    $region34: #{tpu_custom_call.1} parent=1 // pred_check
      _
    $region35: #{tpu_custom_call.1} parent=1 // pred_check_branch
      %63 = sbr.rel (0) target = $region37
    $region36: #{tpu_custom_call.1} parent=1 // pred_region
      %64 = dma.done [#allocation6], 128
    $region37: #{tpu_custom_call.1} parent=1 // pred_fallthru
      _
    // Predicated region
    $region38: #{tpu_custom_call.1} parent=1 // pred_check
      _
    $region39: #{tpu_custom_call.1} parent=1 // pred_check_branch
      %66 = sbr.rel (0) target = $region41
    $region40: #{tpu_custom_call.1} parent=1 // pred_region
      %67 = dma.done [#allocation6], 1024
    $region41: #{tpu_custom_call.1} parent=1 // pred_fallthru
      _
    %v69 = vld [vmem:[#allocation3] sm:$0xf]
    %v70 = vld [vmem:[#allocation3 + $0x4] sm:$0xf]
    %v71 = vld [vmem:[#allocation5] sm:$0xf]
    %v72 = vld [vmem:[#allocation5 + $0x4] sm:$0xf]
    %v73 = vld [vmem:[%s2] sm:$0x1]
    %v75 = vlaneseq
    %v76 = vshrl.u32 %v75, 7
    %v77 = vsub.s32 0, %v76
    %v78 = vrot.slane %v73, %v77
    %v82 = vunpack.c.l.b16 %v69
    %v83 = vunpack.c.l.b16 %v70
    %v84 = vpack.c.b16 %v83, %v82
    %v87 = vunpack.c.l.b16 %v71
    %v88 = vunpack.c.l.b16 %v72
    %v89 = vpack.c.b16 %v88, %v87
    %vm91 = vcmask 130048
    %v93 = vsel %vm91, %v84, 0
    %95 = vmatprep.subr.bf16.mxu0 0
    %96 = vmatpush1.bf16.msra.mxu0 %v89
    %97 = vmatprep.subr.bf16.mxu0 0
    %98 = vmatpush1.bf16.msra.mxu0 0
    %99 = vmatprep.subr.bf16.mxu0 0
    %100 = vmatpush1.bf16.msra.mxu0 0
    %101 = vmatprep.subr.bf16.mxu0 0
    %102 = vmatpush1.bf16.msra.mxu0 0
    %103 = vmatprep.subr.bf16.mxu0 0
    %104 = vmatpush1.bf16.msra.mxu0 0
    %105 = vmatprep.subr.bf16.mxu0 0
    %106 = vmatpush1.bf16.msra.mxu0 0
    %107 = vmatprep.subr.bf16.mxu0 0
    %108 = vmatpush1.bf16.msra.mxu0 0
    %109 = vmatprep.subr.bf16.mxu0 0
    %110 = vmatpush1.bf16.msra.mxu0 0
    %111 = vmatprep.subr.bf16.mxu0 0
    %112 = vmatpush1.bf16.msra.mxu0 0
    %113 = vmatprep.subr.bf16.mxu0 0
    %114 = vmatpush1.bf16.msra.mxu0 0
    %115 = vmatprep.subr.bf16.mxu0 0
    %116 = vmatpush1.bf16.msra.mxu0 0
    %117 = vmatprep.subr.bf16.mxu0 0
    %118 = vmatpush1.bf16.msra.mxu0 0
    %119 = vmatprep.subr.bf16.mxu0 0
    %120 = vmatpush1.bf16.msra.mxu0 0
    %121 = vmatprep.subr.bf16.mxu0 0
    %122 = vmatpush1.bf16.msra.mxu0 0
    %123 = vmatprep.subr.bf16.mxu0 0
    %124 = vmatpush1.bf16.msra.mxu0 0
    %125 = vmatprep.subr.bf16.mxu0 0
    %126 = vmatpush1.bf16.msra.mxu0 0
    %127 = vmatprep.mubr.bf16.mxu0 0
    %128 = vmatmul.mubr.bf16.gmra.mrb[0].mxu0 %v93
    %v129 = vpop.f32.mrb[0].mxu0
    %v130 = vadd.f32 %v78, %v129
    %v131 = vpop.f32.mrb[0].mxu0
    %v132 = vpop.f32.mrb[0].mxu0
    %v133 = vadd.f32 %v78, %v132
    %v134 = vpop.f32.mrb[0].mxu0
    %135 = vdwg.mxu0
    %v136 = vmax.f32 %v130, 0.0
    %v137 = vmax.f32 %v133, 0.0
    %v138 = vpack.c.bf16 %v137, %v136
    %v139 = vld [vmem:[#allocation7] sm:$0xf]
    %v140 = vld [vmem:[#allocation7 + $0x4] sm:$0xf]
    %v141 = vld [vmem:[#allocation7 + $0x8] sm:$0xf]
    %v142 = vld [vmem:[#allocation7 + $0xc] sm:$0xf]
    %v143 = vld [vmem:[#allocation7 + $0x10] sm:$0xf]
    %v144 = vld [vmem:[#allocation7 + $0x14] sm:$0xf]
    %v145 = vld [vmem:[#allocation7 + $0x18] sm:$0xf]
    %v146 = vld [vmem:[#allocation7 + $0x1c] sm:$0xf]
    %v147 = vld [vmem:[#allocation7 + $0x20] sm:$0xf]
    %v148 = vld [vmem:[#allocation7 + $0x24] sm:$0xf]
    %v149 = vld [vmem:[#allocation7 + $0x28] sm:$0xf]
    %v150 = vld [vmem:[#allocation7 + $0x2c] sm:$0xf]
    %v151 = vld [vmem:[#allocation7 + $0x30] sm:$0xf]
    %v152 = vld [vmem:[#allocation7 + $0x34] sm:$0xf]
    %v153 = vld [vmem:[#allocation7 + $0x38] sm:$0xf]
    %v154 = vld [vmem:[#allocation7 + $0x3c] sm:$0xf]
    %v155 = vld [vmem:[%s4] sm:$0x1]
    %v157 = vlaneseq
    %v158 = vshrl.u32 %v157, 7
    %v159 = vsub.s32 0, %v158
    %v160 = vrot.slane %v155, %v159
    %v178 = vunpack.c.l.b16 %v139
    %v179 = vunpack.c.l.b16 %v140
    %v180 = vunpack.c.l.b16 %v141
    %v181 = vunpack.c.l.b16 %v142
    %v182 = vunpack.c.l.b16 %v143
    %v183 = vunpack.c.l.b16 %v144
    %v184 = vunpack.c.l.b16 %v145
    %v185 = vunpack.c.l.b16 %v146
    %v186 = vunpack.c.l.b16 %v147
    %v187 = vunpack.c.l.b16 %v148
    %v188 = vunpack.c.l.b16 %v149
    %v189 = vunpack.c.l.b16 %v150
    %v190 = vunpack.c.l.b16 %v151
    %v191 = vunpack.c.l.b16 %v152
    %v192 = vunpack.c.l.b16 %v153
    %v193 = vunpack.c.l.b16 %v154
    %v194 = vpack.c.b16 %v179, %v178
    %v195 = vpack.c.b16 %v181, %v180
    %v196 = vpack.c.b16 %v183, %v182
    %v197 = vpack.c.b16 %v185, %v184
    %v198 = vpack.c.b16 %v187, %v186
    %v199 = vpack.c.b16 %v189, %v188
    %v200 = vpack.c.b16 %v191, %v190
    %v201 = vpack.c.b16 %v193, %v192
    %210 = vmatprep.subr.bf16.mxu0 0
    %211 = vmatpush1.bf16.msra.mxu0 %v194
    %212 = vmatprep.subr.bf16.mxu0 0
    %213 = vmatpush1.bf16.msra.mxu0 %v195
    %214 = vmatprep.subr.bf16.mxu0 0
    %215 = vmatpush1.bf16.msra.mxu0 %v196
    %216 = vmatprep.subr.bf16.mxu0 0
    %217 = vmatpush1.bf16.msra.mxu0 %v197
    %218 = vmatprep.subr.bf16.mxu0 0
    %219 = vmatpush1.bf16.msra.mxu0 %v198
    %220 = vmatprep.subr.bf16.mxu0 0
    %221 = vmatpush1.bf16.msra.mxu0 %v199
    %222 = vmatprep.subr.bf16.mxu0 0
    %223 = vmatpush1.bf16.msra.mxu0 %v200
    %224 = vmatprep.subr.bf16.mxu0 0
    %225 = vmatpush1.bf16.msra.mxu0 %v201
    %226 = vmatprep.subr.bf16.mxu0 0
    %227 = vmatpush1.bf16.msra.mxu0 0
    %228 = vmatprep.subr.bf16.mxu0 0
    %229 = vmatpush1.bf16.msra.mxu0 0
    %230 = vmatprep.subr.bf16.mxu0 0
    %231 = vmatpush1.bf16.msra.mxu0 0
    %232 = vmatprep.subr.bf16.mxu0 0
    %233 = vmatpush1.bf16.msra.mxu0 0
    %234 = vmatprep.subr.bf16.mxu0 0
    %235 = vmatpush1.bf16.msra.mxu0 0
    %236 = vmatprep.subr.bf16.mxu0 0
    %237 = vmatpush1.bf16.msra.mxu0 0
    %238 = vmatprep.subr.bf16.mxu0 0
    %239 = vmatpush1.bf16.msra.mxu0 0
    %240 = vmatprep.subr.bf16.mxu0 0
    %241 = vmatpush1.bf16.msra.mxu0 0
    %242 = vmatprep.mubr.bf16.mxu0 0
    %243 = vmatmul.mubr.bf16.gmra.mrb[0].mxu0 %v138
    %v244 = vpop.f32.mrb[0].mxu0
    %v245 = vadd.f32 %v160, %v244
    %v246 = vpop.f32.mrb[0].mxu0
    %v247 = vpop.f32.mrb[0].mxu0
    %v248 = vadd.f32 %v160, %v247
    %v249 = vpop.f32.mrb[0].mxu0
    %250 = vdwg.mxu0
    %v251 = vmax.f32 %v245, 0.0
    %v252 = vmax.f32 %v248, 0.0
    %v253 = vld [vmem:[%s5] sm:$0x1]
    %v255 = vlaneseq
    %v256 = vshrl.u32 %v255, 7
    %v257 = vsub.s32 0, %v256
    %v258 = vrot.slane %v253, %v257
    %v260 = vmul.f32 %v251, %v258
    %v261 = vmul.f32 %v252, %v258
    %262 = vadd.xlane.f32.xlu0 %v260
    %v263 = vpop.xlane.xlu0 %262
    %264 = vadd.xlane.f32.xlu0 %v261
    %v265 = vpop.xlane.xlu0 %264
    %s266 = sld [smem:[#allocation2]]
    %v267 = vstv %s266
    %v268 = vadd.f32 %v263, %v267
    %v269 = vadd.f32 %v265, %v267
    %vm270 = vcmask 7168
    %271 = vst.msk [vmem:[%s7] sm:$0xff] %vm270, %v268
    %272 = vst.msk [vmem:[%s7 + $0x8] sm:$0xff] %vm270, %v269
    // Predicated region
    $region42: #{tpu_custom_call.1} parent=1 // pred_check
      _
    $region43: #{tpu_custom_call.1} parent=1 // pred_check_branch
      %274 = sbr.rel (0) target = $region45
    $region44: #{tpu_custom_call.1} parent=1 // pred_region
      _
    $region45: #{tpu_custom_call.1} parent=1 // pred_fallthru
      _
    // Predicated region
    $region46: #{tpu_custom_call.1} parent=1 // pred_check
      _
    $region47: #{tpu_custom_call.1} parent=1 // pred_check_branch
      %276 = sbr.rel (0) target = $region49
    $region48: #{tpu_custom_call.1} parent=1 // pred_region
      _
    $region49: #{tpu_custom_call.1} parent=1 // pred_fallthru
      _
    %277 = vsyncpa [#allocation4], 1
    %278 = vsyncpa [#allocation6], 1

</llo_original>
